<compile_context>
chip_gen: v6e
topology: v6e:2x2x1
jax: 0.10.0
libtpu: 0.0.40
codegen_flags: <defaults>
</compile_context>

<pallas_src>
import functools
import math

import jax
import jax.numpy as jnp
from jax.experimental import pallas as pl
from jax.experimental.pallas import tpu as pltpu

LANES = 128
SUBLANES = 8
STRIP_ROWS = 512          # rows per in-kernel reduction strip (256 KiB for f32)
_MIB = 1024 * 1024


def _round_up(n, m):
    return ((n + m - 1) // m) * m


def _is_v7x():
    try:
        return "v7" in jax.devices()[0].device_kind.lower()
    except Exception:
        return False


def _entropy_kernel(x_ref, o_ref, *, eps, n_rows, block_rows, strip_rows,
                    tiles_per_split, mask_needed, unroll):
    c = pl.program_id(0)   # core-split axis
    i = pl.program_id(1)   # streaming / reduction axis

    # The (1, 8, 128) output block is resident across the i axis: zero it once.
    @pl.when(i == 0)
    def _():
        o_ref[...] = jnp.zeros_like(o_ref)

    n_strips = block_rows // strip_rows
    tile = c * tiles_per_split + i          # logical tile index (may overrun n_tiles)
    row0 = tile * block_rows                # logical first row of this tile

    def tile_partial(masked):
        def strip_term(s, acc):
            start = pl.multiple_of(s * strip_rows, strip_rows)
            xs = x_ref[pl.ds(start, strip_rows), :].astype(jnp.float32)
            if masked:
                rows = row0 + start + jax.lax.broadcasted_iota(jnp.int32, xs.shape, 0)
                xs = jnp.where(rows < n_rows, xs, 0.0)      # mask BEFORE log
            t = xs * jnp.log(xs + eps)
            # Collapse only the major axis -> pure VPU adds into an (8,128) vector;
            # the final cross-lane/sublane reduce happens once, outside the kernel.
            return acc + t.reshape(strip_rows // SUBLANES, SUBLANES, LANES).sum(axis=0)

        init = jnp.zeros((SUBLANES, LANES), jnp.float32)
        if n_strips == 1:
            return strip_term(0, init)
        return jax.lax.fori_loop(0, n_strips, strip_term, init, unroll=unroll)

    if mask_needed:
        # Only the edge / overrun tile pays for masking; interior tiles stay clean.
        is_edge = row0 + block_rows > n_rows

        @pl.when(jnp.logical_not(is_edge))
        def _():
            o_ref[...] += tile_partial(False)[None, :, :]

        @pl.when(is_edge)
        def _():
            o_ref[...] += tile_partial(True)[None, :, :]
    else:
        o_ref[...] += tile_partial(False)[None, :, :]


def entropy_loss(x, eps=1e-12):
    """x: NCHW (or any rank>=2 array with channel axis = 1). Returns scalar f32."""
    shape = x.shape
    assert len(shape) >= 2, "EntropyLoss expects at least (B, C, ...)"
    channels = shape[1]
    total = math.prod(shape)
    # mean is taken over everything except the channel axis: count = total / C
    inv_count = float(channels) / float(total)
    eps = float(eps)

    def xla_entropy_sum(v):
        vf = v.astype(jnp.float32)
        return jnp.sum(vf * jnp.log(vf + eps))

    flat = x.reshape(-1)                 # free (contiguous view)
    n_rows = total // LANES
    rem = total - n_rows * LANES

    itemsize = int(jnp.dtype(x.dtype).itemsize)
    sub_mult = max(SUBLANES, 32 // max(itemsize, 1))   # f32:8, bf16:16, int8/fp8:32

    if n_rows < sub_mult:
        # Tiny input: a kernel launch is not worth it.
        return (-xla_entropy_sum(flat) * inv_count).astype(jnp.float32)

    # Kernel consumes the lane-aligned prefix; <=127-element tail handled in XLA.
    main = flat if rem == 0 else flat[: n_rows * LANES]
    mat = main.reshape(n_rows, LANES)

    is_v7x = _is_v7x()
    tile_bytes_target = (8 if is_v7x else 4) * _MIB
    max_rows = max(sub_mult, tile_bytes_target // (LANES * itemsize))  # mult of 512

    if n_rows >= max_rows:
        block_rows = max_rows
        strip_rows = min(STRIP_ROWS, max_rows)
    elif n_rows <= STRIP_ROWS:
        strip_rows = _round_up(n_rows, sub_mult)
        block_rows = strip_rows
    else:
        strip_rows = STRIP_ROWS
        block_rows = min(_round_up(n_rows, STRIP_ROWS), max_rows)

    n_tiles = pl.cdiv(n_rows, block_rows)

    # 2-way split only where there are 2 TensorCores (v7x); 1 split elsewhere.
    n_splits = 2 if (is_v7x and n_tiles >= 2) else 1
    tiles_per_split = pl.cdiv(n_tiles, n_splits)

    mask_needed = (n_tiles * block_rows != n_rows) or (n_splits * tiles_per_split != n_tiles)

    def in_index(c, i):
        t = jnp.minimum(c * tiles_per_split + i, n_tiles - 1)  # keep DMA in bounds
        return (t, 0)

    kernel = functools.partial(
        _entropy_kernel, eps=eps, n_rows=n_rows, block_rows=block_rows,
        strip_rows=strip_rows, tiles_per_split=tiles_per_split,
        mask_needed=mask_needed, unroll=2)

    tile_bytes = block_rows * LANES * itemsize
    vmem_limit = int(min(30 * _MIB, max(16 * _MIB, 2 * tile_bytes + 4 * _MIB)))

    if n_splits == 2 and hasattr(pltpu, "CORE_PARALLEL"):
        dim_sems = (pltpu.CORE_PARALLEL, pltpu.ARBITRARY)
    else:
        dim_sems = ("parallel" if n_splits == 2 else "arbitrary", "arbitrary")

    partials = pl.pallas_call(
        kernel,
        out_shape=jax.ShapeDtypeStruct((n_splits, SUBLANES, LANES), jnp.float32),
        grid_spec=pltpu.PrefetchScalarGridSpec(
            num_scalar_prefetch=0,
            grid=(n_splits, tiles_per_split),
            in_specs=[pl.BlockSpec((block_rows, LANES), in_index)],
            out_specs=pl.BlockSpec((1, SUBLANES, LANES), lambda c, i: (c, 0, 0)),
        ),
        compiler_params=pltpu.CompilerParams(
            dimension_semantics=dim_sems,
            vmem_limit_bytes=vmem_limit,
        ),
        cost_estimate=pl.CostEstimate(
            flops=3 * total,
            transcendentals=total,
            bytes_accessed=total * itemsize + n_splits * SUBLANES * LANES * 4,
        ),
    )(mat)

    s = jnp.sum(partials)               # single tiny (n_splits, 8, 128) reduce in XLA
    if rem:
        s = s + xla_entropy_sum(flat[n_rows * LANES:])
    return (-s * inv_count).astype(jnp.float32)


def entropy_loss_ref(x, eps=1e-12):
    xf = x.astype(jnp.float32)
    b = xf * jnp.log(xf + eps)
    return (-1.0 * b.sum(axis=1)).mean()


if __name__ == "__main__":
    key = jax.random.PRNGKey(0)
    k0, k1 = jax.random.split(key)

    # Aligned case (matches typical module usage: probability map over channels).
    B, C, H, W = 2, 4, 16, 16
    x = jax.nn.softmax(jax.random.normal(k0, (B, C, H, W), dtype=jnp.float32), axis=1)
    out = entropy_loss(x)
    jax.block_until_ready(out)
    ref = entropy_loss_ref(x)
    assert jnp.allclose(out, ref, rtol=1e-5, atol=1e-5), (out, ref)

    # Misaligned case: exercises the masked edge tile + <128-element XLA tail path.
    y = jax.nn.softmax(jax.random.normal(k1, (2, 5, 13, 11), dtype=jnp.float32), axis=1)
    out2 = entropy_loss(y)
    jax.block_until_ready(out2)
    ref2 = entropy_loss_ref(y)
    assert jnp.allclose(out2, ref2, rtol=1e-5, atol=1e-5), (out2, ref2)

    print("KERNEL_OK")
</pallas_src>

<mosaic_0001>
module attributes {stable_mosaic.version = 11 : i64} {
  func.func @_entropy_kernel(%arg0: i32, %arg1: i32, %arg2: memref<16x128xf32, #tpu.memory_space<vmem>>, %arg3: memref<1x8x128xf32, #tpu.memory_space<vmem>>) attributes {dimension_semantics = [#tpu.dimension_semantics<arbitrary>, #tpu.dimension_semantics<arbitrary>], iteration_bounds = array<i64: 1, 1>, scalar_prefetch = 0 : i64, scratch_operands = 0 : i64, tpu.core_type = #tpu.core_type<tc>, window_params = [{transform_indices = @transform_0, window_bounds = array<i64: 16, 128>}, {transform_indices = @transform_1, window_bounds = array<i64: 1, 8, 128>}]} {
    %c0_i32 = arith.constant 0 : i32
    %0 = arith.cmpi eq, %arg1, %c0_i32 : i32
    %1 = arith.extui %0 : i1 to i32
    %c0_i32_0 = arith.constant 0 : i32
    %2 = arith.cmpi ne, %1, %c0_i32_0 : i32
    scf.if %2 {
      %cst_10 = arith.constant 0.000000e+00 : f32
      %18 = vector.broadcast %cst_10 : f32 to vector<1x8x128xf32>
      %c0_11 = arith.constant 0 : index
      %c0_12 = arith.constant 0 : index
      %c0_13 = arith.constant 0 : index
      %19 = vector.load %arg3[%c0_11, %c0_12, %c0_13] : memref<1x8x128xf32, #tpu.memory_space<vmem>>, vector<1x8x128xf32>
      tpu.vector_store %arg3[%c0_11, %c0_12, %c0_13], %18 {strides = array<i32>} : memref<1x8x128xf32, #tpu.memory_space<vmem>>, vector<1x8x128xf32>,
    } else {
    }
    %c0 = arith.constant 0 : index
    %c0_1 = arith.constant 0 : index
    %c0_2 = arith.constant 0 : index
    %3 = vector.load %arg3[%c0, %c0_1, %c0_2] : memref<1x8x128xf32, #tpu.memory_space<vmem>>, vector<1x8x128xf32>
    %cst = arith.constant 0.000000e+00 : f32
    %4 = vector.broadcast %cst : f32 to vector<8x128xf32>
    %c0_i32_3 = arith.constant 0 : i32
    %5 = tpu.assume_multiple %c0_i32_3, 16 : i32
    %6 = arith.index_cast %5 : i32 to index
    %c0_4 = arith.constant 0 : index
    %7 = vector.load %arg2[%6, %c0_4] : memref<16x128xf32, #tpu.memory_space<vmem>>, vector<16x128xf32>
    %cst_5 = arith.constant 9.99999996E-13 : f32
    %8 = vector.broadcast %cst_5 : f32 to vector<16x128xf32>
    %9 = arith.addf %7, %8 : vector<16x128xf32>
    %10 = math.log %9 : vector<16x128xf32>
    %11 = arith.mulf %7, %10 : vector<16x128xf32>
    %12 = vector.shape_cast %11 : vector<16x128xf32> to vector<2x8x128xf32>
    %cst_6 = arith.constant dense<0.000000e+00> : vector<8x128xf32>
    %13 = vector.multi_reduction <add>, %12, %cst_6 [0] : vector<2x8x128xf32> to vector<8x128xf32>
    %14 = arith.addf %4, %13 : vector<8x128xf32>
    %15 = vector.shape_cast %14 : vector<8x128xf32> to vector<1x8x128xf32>
    %16 = arith.addf %3, %15 : vector<1x8x128xf32>
    %c0_7 = arith.constant 0 : index
    %c0_8 = arith.constant 0 : index
    %c0_9 = arith.constant 0 : index
    %17 = vector.load %arg3[%c0_7, %c0_8, %c0_9] : memref<1x8x128xf32, #tpu.memory_space<vmem>>, vector<1x8x128xf32>
    tpu.vector_store %arg3[%c0_7, %c0_8, %c0_9], %16 {strides = array<i32>} : memref<1x8x128xf32, #tpu.memory_space<vmem>>, vector<1x8x128xf32>,
    return
  }
  func.func @transform_0(%arg0: i32, %arg1: i32) -> (i32, i32) {
    %c1_i32 = arith.constant 1 : i32
    %0 = arith.muli %arg0, %c1_i32 : i32
    %1 = arith.addi %0, %arg1 : i32
    %c0_i32 = arith.constant 0 : i32
    %2 = arith.minsi %1, %c0_i32 : i32
    %c0_i32_0 = arith.constant 0 : i32
    %c0_i32_1 = arith.constant 0 : i32
    return %2, %c0_i32_0 : i32, i32
  }
  func.func @transform_1(%arg0: i32, %arg1: i32) -> (i32, i32, i32) {
    %c0_i32 = arith.constant 0 : i32
    %c0_i32_0 = arith.constant 0 : i32
    %c0_i32_1 = arith.constant 0 : i32
    return %arg0, %c0_i32, %c0_i32_0 : i32, i32, i32
  }
}

</mosaic_0001>

<llo_original>
// kernel: tpu_custom_call.1
$region0: #{tpu_custom_call.1}
  #allocation0 [shape = 'u32[]', space=smem, size = 0x4, offset = 0x4, fixed_abs, tag = 'smem constant byte address 0x4 - core index']
  #allocation1 [shape = 'u32[144,128]{1,0:T(1,128)}', space=vmem, size = 0x12000, scoped, tag = 'internal scratch']
  %s0 = inlined_call_operand.hbm [shape: f32[16,128], index: 0, kind: input, shape index: {}]
  %s1 = inlined_call_operand.hbm [shape: f32[1,8,128], index: 1, kind: output, shape index: {}]
  %s2 = sld [smem:[#allocation0]]
  $region22: #{tpu_custom_call.1} parent=0
    _
  %s4 = ssub.s32 1, %s2
  %s5 = scalar_select 0, %s4, %s2
  $region1: #{tpu_custom_call.1} parent=0
    #allocation2 [shape = 'u8[8192]{0}', space=vmem, size = 0x2000, scoped, tag = 'input window, operand 0, single buffered']
    #allocation3 [shape = 's32[1]{0}', space=sflag, size = 0x4, scoped, tag = 'scoped memory for tpu_custom_call.1']
    #allocation4 [shape = 's32[1]{0}', space=sflag, size = 0x4, scoped, tag = 'scoped memory for tpu_custom_call.1']
    #allocation5 [shape = 'u8[4096]{0}', space=vmem, size = 0x1000, scoped, tag = 'output window, operand 0, single buffered']
    %6 = vsyncpa [#allocation3], 0
    %7 = vsyncpa [#allocation4], 0
    // Predicated region
    $region2: #{tpu_custom_call.1} parent=1 // pred_check
      _
    $region3: #{tpu_custom_call.1} parent=1 // pred_check_branch
      %9 = sbr.rel (0) target = $region5
    $region4: #{tpu_custom_call.1} parent=1 // pred_region
      %s10 = sadd.s32 0, 0
      %p11 = scmp.lt.s32.totalorder %s10, 0
      %s12 = scalar_select %p11, %s10, 0
      %s13 = smul.u32 2, %s12
      %s15 = ssub.s32 256, 256
      %16 = vsyncadd [#allocation3], %s15
      %s17 = smul.addr %s13, 128
      %s18 = scalar_lea.hbm %s0, %s17
      %s19 = sshll.u32 [#allocation2], 4
      %s20 = int_to_ptr.vmem [resolvable:$true] %s19
      %25 = dma.hbm_to_vmem [thread:$0]  %s18, 256, %s20, [#allocation3], 128, 128, 8
    $region5: #{tpu_custom_call.1} parent=1 // pred_fallthru
      _
    // Predicated region
    $region6: #{tpu_custom_call.1} parent=1 // pred_check
      _
    $region7: #{tpu_custom_call.1} parent=1 // pred_check_branch
      %27 = sbr.rel (0) target = $region9
    $region8: #{tpu_custom_call.1} parent=1 // pred_region
      %28 = dma.done [#allocation3], 256
    $region9: #{tpu_custom_call.1} parent=1 // pred_fallthru
      _
    %s29 = sadd.s32 0, 0
    %p30 = scmp.lt.s32.totalorder %s29, 0
    %s31 = scalar_select %p30, %s29, 0
    %s32 = smul.u32 2, %s31
    %p33 = scmp.eq.s32.totalorder 0, 0
    // Predicated region
    $region10: #{tpu_custom_call.1} parent=1 // pred_check
      %p34 = pneg %p33
    $region11: #{tpu_custom_call.1} parent=1 // pred_check_branch
      %36 = sbr.rel (%p34) target = $region13
    $region12: #{tpu_custom_call.1} parent=1 // pred_region
      %37 = vst [vmem:[#allocation5] sm:$0xff] 0.0
    $region13: #{tpu_custom_call.1} parent=1 // pred_fallthru
      _
    %v38 = vld [vmem:[#allocation5] sm:$0xff]
    %v39 = vld [vmem:[#allocation2] sm:$0xff]
    %v40 = vld [vmem:[#allocation2 + $0x8] sm:$0xff]
    %v41 = vadd.f32 %v39, 1e-12
    %v42 = vadd.f32 %v40, 1e-12
    %v43 = vlog2.pop %v41
    %v44 = vmul.f32 %v43, 0.6931472
    %v45 = vlog2.pop %v42
    %v46 = vmul.f32 %v45, 0.6931472
    %v47 = vmul.f32 %v39, %v44
    %v48 = vmul.f32 %v40, %v46
    %v49 = vadd.f32 %v47, %v48
    %v50 = vadd.f32 %v49, 0.0
    %v51 = vadd.f32 %v38, %v50
    %52 = vst [vmem:[#allocation5] sm:$0xff] %v51
    // Predicated region
    $region14: #{tpu_custom_call.1} parent=1 // pred_check
      _
    $region15: #{tpu_custom_call.1} parent=1 // pred_check_branch
      %54 = sbr.rel (0) target = $region17
    $region16: #{tpu_custom_call.1} parent=1 // pred_region
      %s56 = ssub.s32 128, 128
      %57 = vsyncadd [#allocation4], %s56
      %s59 = sshll.u32 [#allocation5], 4
      %s60 = int_to_ptr.vmem [resolvable:$true] %s59
      %62 = dma.vmem_to_hbm [thread:$0]  %s60, 128, %s1, [#allocation4]
    $region17: #{tpu_custom_call.1} parent=1 // pred_fallthru
      _
    // Predicated region
    $region18: #{tpu_custom_call.1} parent=1 // pred_check
      _
    $region19: #{tpu_custom_call.1} parent=1 // pred_check_branch
      %64 = sbr.rel (0) target = $region21
    $region20: #{tpu_custom_call.1} parent=1 // pred_region
      %65 = dma.done [#allocation4], 128
    $region21: #{tpu_custom_call.1} parent=1 // pred_fallthru
      _
    %66 = vsyncpa [#allocation3], 1
    %67 = vsyncpa [#allocation4], 1

</llo_original>
